<compile_context>
chip_gen: v5e
topology: v5e:2x2
jax: 0.10.0
libtpu: 0.0.40
codegen_flags: <defaults>
</compile_context>

<pallas_src>
import functools

import jax
import jax.numpy as jnp
import numpy as np
from jax import lax
from jax.experimental import pallas as pl
from jax.experimental.pallas import tpu as pltpu

NEG_SLOPE = 0.01  # nn.LeakyReLU default negative_slope


def _pair(v):
    return (v, v) if isinstance(v, int) else tuple(v)


# -----------------------------------------------------------------------------
# Fused kernel
# -----------------------------------------------------------------------------
def _conv_block_kernel(x_ref, w_ref, pre_ref, scale_ref, shift_ref, o_ref,
                       acc_ref, *, NB, H, H_out, ph, sh, dh, kh,
                       has_conv_bias, has_bn, residual):
    """Fused ConvBlock2D forward for NB stacked batch elements.

    x_ref    : (NB*H, W*Cin)        f32 input slab (lane-dense (W,Cin) flat)
    w_ref    : (kh, W*Cin, n_out)   bf16 Toeplitz-expanded conv weight
    pre_ref  : (1, n_out)           conv bias tiled over W_out (no-BN case)
    scale_ref: (1, n_out)           folded eval-BN scale tiled over W_out
    shift_ref: (1, n_out)           folded eval-BN shift tiled over W_out
    o_ref    : (NB*H_out, n_out)
    acc_ref  : (NB*H_out, n_out)    f32 accumulator scratch
    """
    n_out = o_ref.shape[-1]

    # Output row ho is touched by kernel row ki iff 0 <= ho*sh + ki*dh - ph < H.
    # Shrinking each tap's output-row range replaces the old zero-filled halo
    # scratch: taps that land in the padding are simply never computed.
    def _cover(ki):
        lo = max(0, -(-(ph - ki * dh) // sh))                 # ceil div
        hi = min(H_out - 1, (H - 1 + ph - ki * dh) // sh)
        return lo, hi

    kis = [ki for ki in range(kh) if _cover(ki)[0] <= _cover(ki)[1]]
    lo0, hi0 = _cover(kis[0]) if kis else (0, -1)

    # Zero only the rows the first tap does not initialise (<= ~ph rows/sample).
    for b in range(NB):
        if lo0 > 0:
            acc_ref[b * H_out:b * H_out + lo0, :] = (
                jnp.zeros((lo0, n_out), jnp.float32))
        if hi0 < H_out - 1:
            acc_ref[b * H_out + hi0 + 1:(b + 1) * H_out, :] = (
                jnp.zeros((H_out - 1 - hi0, n_out), jnp.float32))

    if sh == 1:
        lhs_all = x_ref[...].astype(jnp.bfloat16)    # native-rate MXU operand

    for idx, ki in enumerate(kis):
        lo, hi = _cover(ki)
        cnt = hi - lo + 1
        r0 = lo * sh + ki * dh - ph                  # first input row this tap
        if sh == 1:
            # One big (NB*H, K) @ (K, n_out) matmul per kernel row; each
            # sample's rows are carved out of it (waste = a few halo rows).
            part = jnp.dot(lhs_all, w_ref[ki],
                           preferred_element_type=jnp.float32)
            for b in range(NB):
                dst = slice(b * H_out + lo, b * H_out + hi + 1)
                src = slice(b * H + r0, b * H + r0 + cnt)
                if idx == 0:
                    acc_ref[dst, :] = part[src, :]
                else:
                    acc_ref[dst, :] += part[src, :]
        else:
            # Strided-H conv: strided ref read, no full-slab load + re-slice.
            for b in range(NB):
                lhs_b = x_ref[pl.ds(b * H + r0, cnt, stride=sh), :].astype(
                    jnp.bfloat16)
                part = jnp.dot(lhs_b, w_ref[ki],
                               preferred_element_type=jnp.float32)
                dst = slice(b * H_out + lo, b * H_out + hi + 1)
                if idx == 0:
                    acc_ref[dst, :] = part
                else:
                    acc_ref[dst, :] += part

    # Epilogue: bias -> (Dropout2d = identity at inference) -> LeakyReLU ->
    # folded eval-BatchNorm -> optional residual.
    # TODO(synk): training-mode Dropout2d / batch-statistics BatchNorm are not
    # implemented (inference semantics only).
    v = acc_ref[...]
    if has_conv_bias:                 # conv bias exists only when no BN
        v = v + pre_ref[...]
    v = jnp.where(v > 0, v, NEG_SLOPE * v)           # LeakyReLU(0.01)
    if has_bn:
        v = v * scale_ref[...] + shift_ref[...]
    if residual:                      # requires Cin==Cout and same H,W
        v = v + x_ref[...]
    o_ref[...] = v.astype(o_ref.dtype)


# -----------------------------------------------------------------------------
# One-time (weight-load-time) parameter folding — runs on the HOST, not per call
# -----------------------------------------------------------------------------
def fold_conv_block_params(params, *, W, kernel, stride=(1, 1), padding=0,
                           dilation=1, groups=1, batch_norm=True,
                           residual=False):
    """Fold ConvBlock2D params into (bf16 Toeplitz weight, lane tiles) + meta."""
    kh, kw = _pair(kernel)
    sh, sw = _pair(stride)
    ph, pw = _pair(padding)
    dh, dw = _pair(dilation)
    w = np.asarray(params["conv_w"], np.float32)   # (Cout, Cin//groups, kh, kw)
    Cout, Cin_g, _, _ = w.shape
    Cin = Cin_g * groups
    Cout_g = Cout // groups
    W_out = (W + 2 * pw - dw * (kw - 1) - 1) // sw + 1
    n_out = W_out * Cout

    # Toeplitz expansion: folds the kw taps, input channels, groups, W padding,
    # W stride and W dilation into one (W*Cin, W_out*Cout) contraction per kh.
    wo, kj, ci, co = np.meshgrid(np.arange(W_out), np.arange(kw),
                                 np.arange(Cin_g), np.arange(Cout),
                                 indexing="ij")
    src_w = wo * sw + kj * dw - pw                 # input W position of the tap
    valid = (src_w >= 0) & (src_w < W)             # taps in the pad contribute 0
    rows = (src_w * Cin + (co // Cout_g) * Cin_g + ci)[valid]
    cols = (wo * Cout + co)[valid]
    co_v, ci_v, kj_v = co[valid], ci[valid], kj[valid]
    wbig = np.zeros((kh, W * Cin, n_out), np.float32)
    for ki in range(kh):                           # kh is tiny (1-3)
        wbig[ki, rows, cols] = w[co_v, ci_v, ki, kj_v]

    if batch_norm:
        scale = np.asarray(params["bn_gamma"], np.float32) / np.sqrt(
            np.asarray(params["bn_var"], np.float32) + float(params["bn_eps"]))
        shift = (np.asarray(params["bn_beta"], np.float32)
                 - np.asarray(params["bn_mean"], np.float32) * scale)
        pre = np.zeros((Cout,), np.float32)
    else:
        scale = np.ones((Cout,), np.float32)
        shift = np.zeros((Cout,), np.float32)
        pre = np.asarray(params["conv_b"], np.float32)

    arrays = dict(
        wbig=jnp.asarray(wbig, jnp.bfloat16),              # bf16 MXU operand
        pre=jnp.asarray(np.tile(pre, W_out)[None, :], jnp.float32),
        scale=jnp.asarray(np.tile(scale, W_out)[None, :], jnp.float32),
        shift=jnp.asarray(np.tile(shift, W_out)[None, :], jnp.float32),
    )
    meta = dict(Cin=Cin, Cout=Cout, W=W, W_out=W_out, kh=kh, sh=sh, ph=ph,
                dh=dh, has_conv_bias=not batch_norm, has_bn=batch_norm,
                residual=residual)
    return arrays, meta


def _pick_batch_tile(N, rows_per_sample):
    """Batch elements stacked per grid step: aim for >=128 matmul rows
    (fills the 256-wide MXU on v6e/v7x), cap the per-step footprint, and
    prefer >=2 grid steps (both v7x TensorCores) when that doesn't cost M."""
    best_d, best_score = 1, None
    for d in range(1, N + 1):
        if N % d:
            continue
        rows = d * rows_per_sample
        if d > 1 and rows > 512:
            continue
        score = (min(rows, 128), int(N // d >= 2), -rows)
        if best_score is None or score > best_score:
            best_d, best_score = d, score
    return best_d


# -----------------------------------------------------------------------------
# Forward wrappers
# -----------------------------------------------------------------------------
def conv_block_2d_forward_fused(x_fused, arrays, meta):
    """Fused-layout forward.  x_fused: (N, H, W*Cin) -> (N, H_out, W_out*Cout).
    Keep activations in this layout between stacked ConvBlock2D layers."""
    N, H, K_in = x_fused.shape
    Cin, Cout = meta["Cin"], meta["Cout"]
    W, W_out = meta["W"], meta["W_out"]
    kh, sh, ph, dh = meta["kh"], meta["sh"], meta["ph"], meta["dh"]
    assert K_in == W * Cin
    H_out = (H + 2 * ph - dh * (kh - 1) - 1) // sh + 1
    n_out = W_out * Cout
    if meta["residual"]:
        assert Cin == Cout and H_out == H and W_out == W, \
            "residual=True needs matching in/out shapes"

    NB = _pick_batch_tile(N, max(H, H_out))
    G = N // NB
    x3 = x_fused.reshape(G, NB * H, K_in)          # free, row-major grouping

    kern = functools.partial(
        _conv_block_kernel, NB=NB, H=H, H_out=H_out, ph=ph, sh=sh, dh=dh,
        kh=kh, has_conv_bias=meta["has_conv_bias"], has_bn=meta["has_bn"],
        residual=meta["residual"])

    # Modest explicit scoped-VMEM request (safe on v5e/v6e/v7x); at these
    # shapes actual use is < 1 MiB, the floor just makes the budget explicit.
    est = (arrays["wbig"].size * 2 + 2 * NB * H * K_in * 4
           + 3 * NB * H_out * n_out * 4 + 6 * n_out * 4)
    vmem_limit = int(min(64 * 1024 * 1024, max(4 * est, 16 * 1024 * 1024)))

    out3 = pl.pallas_call(
        kern,
        out_shape=jax.ShapeDtypeStruct((G, NB * H_out, n_out), x_fused.dtype),
        grid=(G,),
        in_specs=[
            pl.BlockSpec((None, NB * H, K_in), lambda g: (g, 0, 0)),
            # constant index map -> folded weight stays VMEM-resident
            pl.BlockSpec((kh, K_in, n_out), lambda g: (0, 0, 0)),
            pl.BlockSpec((1, n_out), lambda g: (0, 0)),
            pl.BlockSpec((1, n_out), lambda g: (0, 0)),
            pl.BlockSpec((1, n_out), lambda g: (0, 0)),
        ],
        out_specs=pl.BlockSpec((None, NB * H_out, n_out), lambda g: (g, 0, 0)),
        scratch_shapes=[pltpu.VMEM((NB * H_out, n_out), jnp.float32)],
        compiler_params=pltpu.CompilerParams(
            dimension_semantics=("parallel",),
            vmem_limit_bytes=vmem_limit),
    )(x3, arrays["wbig"], arrays["pre"], arrays["scale"], arrays["shift"])
    return out3.reshape(N, H_out, n_out)


def conv_block_2d_forward(x_nchw, arrays, meta):
    """PyTorch-layout convenience wrapper (NCHW in / NCHW out).  The layout
    transposes live only here; stacked blocks should call the fused version."""
    N, Cin, H, W = x_nchw.shape
    x_fused = jnp.transpose(x_nchw, (0, 2, 3, 1)).reshape(N, H, W * Cin)
    out = conv_block_2d_forward_fused(x_fused, arrays, meta)
    H_out = out.shape[1]
    return out.reshape(N, H_out, meta["W_out"], meta["Cout"]).transpose(0, 3, 1, 2)


# -----------------------------------------------------------------------------
# Deterministic parameter init + pure-JAX reference (mirrors PyTorch forward)
# -----------------------------------------------------------------------------
def init_params(key, in_filters, out_filters, kernel, groups=1, batch_norm=True):
    kh, kw = _pair(kernel)
    kw_, kb, kg, kbt, km, kv = jax.random.split(key, 6)
    fan_in = (in_filters // groups) * kh * kw
    p = {"conv_w": jax.random.normal(
        kw_, (out_filters, in_filters // groups, kh, kw), jnp.float32)
        / np.sqrt(fan_in)}
    if batch_norm:
        p["bn_gamma"] = 1.0 + 0.1 * jax.random.normal(kg, (out_filters,), jnp.float32)
        p["bn_beta"] = 0.1 * jax.random.normal(kbt, (out_filters,), jnp.float32)
        p["bn_mean"] = 0.1 * jax.random.normal(km, (out_filters,), jnp.float32)
        p["bn_var"] = jnp.abs(1.0 + 0.1 * jax.random.normal(kv, (out_filters,), jnp.float32))
        p["bn_eps"] = 1e-5
    else:
        p["conv_b"] = 0.1 * jax.random.normal(kb, (out_filters,), jnp.float32)
    return p


def ref_forward(x, params, *, kernel, stride, padding, dilation, groups,
                batch_norm, residual):
    kh, kw = _pair(kernel)
    sh, sw = _pair(stride)
    ph, pw = _pair(padding)
    dh, dw = _pair(dilation)
    y = lax.conv_general_dilated(
        x, params["conv_w"], window_strides=(sh, sw),
        padding=((ph, ph), (pw, pw)), rhs_dilation=(dh, dw),
        feature_group_count=groups,
        dimension_numbers=("NCHW", "OIHW", "NCHW"))
    if not batch_norm:
        y = y + params["conv_b"][None, :, None, None]
    y = jnp.where(y > 0, y, NEG_SLOPE * y)
    if batch_norm:
        scale = params["bn_gamma"] * lax.rsqrt(params["bn_var"] + params["bn_eps"])
        shift = params["bn_beta"] - params["bn_mean"] * scale
        y = y * scale[None, :, None, None] + shift[None, :, None, None]
    return y + x if residual else y


if __name__ == "__main__":
    key = jax.random.PRNGKey(0)
    configs = [
        dict(N=2, Cin=4, H=16, W=16, Cout=8, kernel=(3, 3), stride=1,
             padding=1, dilation=1, groups=1, batch_norm=True, residual=False),
        dict(N=2, Cin=8, H=16, W=16, Cout=8, kernel=(1, 5), stride=1,
             padding=(0, 4), dilation=(1, 2), groups=1, batch_norm=True,
             residual=True),
        dict(N=2, Cin=8, H=16, W=16, Cout=8, kernel=(3, 3), stride=1,
             padding=1, dilation=1, groups=2, batch_norm=False, residual=False),
    ]
    for cfg in configs:
        key, kx, kp = jax.random.split(key, 3)
        x = jax.random.normal(kx, (cfg["N"], cfg["Cin"], cfg["H"], cfg["W"]),
                              jnp.float32)
        params = init_params(kp, cfg["Cin"], cfg["Cout"], cfg["kernel"],
                             groups=cfg["groups"], batch_norm=cfg["batch_norm"])
        kwargs = dict(kernel=cfg["kernel"], stride=cfg["stride"],
                      padding=cfg["padding"], dilation=cfg["dilation"],
                      groups=cfg["groups"], batch_norm=cfg["batch_norm"],
                      residual=cfg["residual"])
        # One-time host-side folding (not on the per-call forward path).
        arrays, meta = fold_conv_block_params(
            params, W=cfg["W"], kernel=cfg["kernel"], stride=cfg["stride"],
            padding=cfg["padding"], dilation=cfg["dilation"],
            groups=cfg["groups"], batch_norm=cfg["batch_norm"],
            residual=cfg["residual"])
        fwd = jax.jit(lambda xx, aa, m=meta: conv_block_2d_forward(xx, aa, m))
        out = jax.block_until_ready(fwd(x, arrays))
        ref = ref_forward(x, params, **kwargs)
        assert out.shape == ref.shape, (out.shape, ref.shape)
        # bf16 matmul operands with f32 accumulation -> looser tolerance than f32.
        np.testing.assert_allclose(np.asarray(out), np.asarray(ref),
                                   rtol=2e-2, atol=5e-2)
    print("KERNEL_OK")
</pallas_src>

<mosaic_0001>
module attributes {stable_mosaic.version = 11 : i64} {
  func.func @_conv_block_kernel(%arg0: i32, %arg1: memref<1x32x64xf32, #tpu.memory_space<vmem>>, %arg2: memref<3x64x128xbf16, #tpu.memory_space<vmem>>, %arg3: memref<1x128xf32, #tpu.memory_space<vmem>>, %arg4: memref<1x128xf32, #tpu.memory_space<vmem>>, %arg5: memref<1x128xf32, #tpu.memory_space<vmem>>, %arg6: memref<1x32x128xf32, #tpu.memory_space<vmem>>, %arg7: memref<32x128xf32, #tpu.memory_space<vmem>>) attributes {dimension_semantics = [#tpu.dimension_semantics<parallel>], iteration_bounds = array<i64: 1>, scalar_prefetch = 0 : i64, scratch_operands = 1 : i64, tpu.core_type = #tpu.core_type<tc>, window_params = [{transform_indices = @transform_0, window_bounds = array<i64: 1, 32, 64>}, {pipeline_mode = #tpu.pipeline_mode<synchronous>, transform_indices = @transform_1, window_bounds = array<i64: 3, 64, 128>}, {pipeline_mode = #tpu.pipeline_mode<synchronous>, transform_indices = @transform_2, window_bounds = array<i64: 1, 128>}, {pipeline_mode = #tpu.pipeline_mode<synchronous>, transform_indices = @transform_3, window_bounds = array<i64: 1, 128>}, {pipeline_mode = #tpu.pipeline_mode<synchronous>, transform_indices = @transform_4, window_bounds = array<i64: 1, 128>}, {transform_indices = @transform_5, window_bounds = array<i64: 1, 32, 128>}]} {
    %cst = arith.constant 0.000000e+00 : f32
    %0 = vector.broadcast %cst : f32 to vector<1x128xf32>
    %c0 = arith.constant 0 : index
    %c0_0 = arith.constant 0 : index
    %1 = vector.load %arg7[%c0, %c0_0] : memref<32x128xf32, #tpu.memory_space<vmem>>, vector<1x128xf32>
    tpu.vector_store %arg7[%c0, %c0_0], %0 {strides = array<i32>} : memref<32x128xf32, #tpu.memory_space<vmem>>, vector<1x128xf32>,
    %cst_1 = arith.constant 0.000000e+00 : f32
    %2 = vector.broadcast %cst_1 : f32 to vector<1x128xf32>
    %c16 = arith.constant 16 : index
    %c0_2 = arith.constant 0 : index
    %3 = vector.load %arg7[%c16, %c0_2] : memref<32x128xf32, #tpu.memory_space<vmem>>, vector<1x128xf32>
    tpu.vector_store %arg7[%c16, %c0_2], %2 {strides = array<i32>} : memref<32x128xf32, #tpu.memory_space<vmem>>, vector<1x128xf32>,
    %c0_3 = arith.constant 0 : index
    %c0_4 = arith.constant 0 : index
    %c0_5 = arith.constant 0 : index
    %4 = vector.load %arg1[%c0_3, %c0_4, %c0_5] : memref<1x32x64xf32, #tpu.memory_space<vmem>>, vector<1x32x64xf32>
    %5 = vector.shape_cast %4 : vector<1x32x64xf32> to vector<32x64xf32>
    %6 = arith.truncf %5 : vector<32x64xf32> to vector<32x64xbf16>
    %c0_6 = arith.constant 0 : index
    %c0_7 = arith.constant 0 : index
    %c0_8 = arith.constant 0 : index
    %7 = vector.load %arg2[%c0_6, %c0_7, %c0_8] : memref<3x64x128xbf16, #tpu.memory_space<vmem>>, vector<1x64x128xbf16>
    %8 = vector.shape_cast %7 : vector<1x64x128xbf16> to vector<64x128xbf16>
    %cst_9 = arith.constant dense<0.000000e+00> : vector<32x128xf32>
    %9 = tpu.matmul %6, %8, %cst_9 {dimension_numbers = #tpu.dot_dimension_numbers<[1], [0], [0], [1], [0, 0, 1, 1], [], []>} : vector<32x64xbf16>, vector<64x128xbf16>, vector<32x128xf32> -> vector<32x128xf32>
    %10 = vector.extract_strided_slice %9 {offsets = [0, 0], sizes = [15, 128], strides = [1, 1]} : vector<32x128xf32> to vector<15x128xf32>
    %c1 = arith.constant 1 : index
    %c0_10 = arith.constant 0 : index
    %11 = vector.load %arg7[%c1, %c0_10] : memref<32x128xf32, #tpu.memory_space<vmem>>, vector<15x128xf32>
    tpu.vector_store %arg7[%c1, %c0_10], %10 {strides = array<i32>} : memref<32x128xf32, #tpu.memory_space<vmem>>, vector<15x128xf32>,
    %12 = vector.extract_strided_slice %9 {offsets = [16, 0], sizes = [15, 128], strides = [1, 1]} : vector<32x128xf32> to vector<15x128xf32>
    %c17 = arith.constant 17 : index
    %c0_11 = arith.constant 0 : index
    %13 = vector.load %arg7[%c17, %c0_11] : memref<32x128xf32, #tpu.memory_space<vmem>>, vector<15x128xf32>
    tpu.vector_store %arg7[%c17, %c0_11], %12 {strides = array<i32>} : memref<32x128xf32, #tpu.memory_space<vmem>>, vector<15x128xf32>,
    %c1_12 = arith.constant 1 : index
    %c0_13 = arith.constant 0 : index
    %c0_14 = arith.constant 0 : index
    %14 = vector.load %arg2[%c1_12, %c0_13, %c0_14] : memref<3x64x128xbf16, #tpu.memory_space<vmem>>, vector<1x64x128xbf16>
    %15 = vector.shape_cast %14 : vector<1x64x128xbf16> to vector<64x128xbf16>
    %cst_15 = arith.constant dense<0.000000e+00> : vector<32x128xf32>
    %16 = tpu.matmul %6, %15, %cst_15 {dimension_numbers = #tpu.dot_dimension_numbers<[1], [0], [0], [1], [0, 0, 1, 1], [], []>} : vector<32x64xbf16>, vector<64x128xbf16>, vector<32x128xf32> -> vector<32x128xf32>
    %c0_16 = arith.constant 0 : index
    %c0_17 = arith.constant 0 : index
    %17 = vector.load %arg7[%c0_16, %c0_17] : memref<32x128xf32, #tpu.memory_space<vmem>>, vector<16x128xf32>
    %18 = vector.extract_strided_slice %16 {offsets = [0, 0], sizes = [16, 128], strides = [1, 1]} : vector<32x128xf32> to vector<16x128xf32>
    %19 = arith.addf %17, %18 : vector<16x128xf32>
    %c0_18 = arith.constant 0 : index
    %c0_19 = arith.constant 0 : index
    %20 = vector.load %arg7[%c0_18, %c0_19] : memref<32x128xf32, #tpu.memory_space<vmem>>, vector<16x128xf32>
    tpu.vector_store %arg7[%c0_18, %c0_19], %19 {strides = array<i32>} : memref<32x128xf32, #tpu.memory_space<vmem>>, vector<16x128xf32>,
    %c16_20 = arith.constant 16 : index
    %c0_21 = arith.constant 0 : index
    %21 = vector.load %arg7[%c16_20, %c0_21] : memref<32x128xf32, #tpu.memory_space<vmem>>, vector<16x128xf32>
    %22 = vector.extract_strided_slice %16 {offsets = [16, 0], sizes = [16, 128], strides = [1, 1]} : vector<32x128xf32> to vector<16x128xf32>
    %23 = arith.addf %21, %22 : vector<16x128xf32>
    %c16_22 = arith.constant 16 : index
    %c0_23 = arith.constant 0 : index
    %24 = vector.load %arg7[%c16_22, %c0_23] : memref<32x128xf32, #tpu.memory_space<vmem>>, vector<16x128xf32>
    tpu.vector_store %arg7[%c16_22, %c0_23], %23 {strides = array<i32>} : memref<32x128xf32, #tpu.memory_space<vmem>>, vector<16x128xf32>,
    %c2 = arith.constant 2 : index
    %c0_24 = arith.constant 0 : index
    %c0_25 = arith.constant 0 : index
    %25 = vector.load %arg2[%c2, %c0_24, %c0_25] : memref<3x64x128xbf16, #tpu.memory_space<vmem>>, vector<1x64x128xbf16>
    %26 = vector.shape_cast %25 : vector<1x64x128xbf16> to vector<64x128xbf16>
    %cst_26 = arith.constant dense<0.000000e+00> : vector<32x128xf32>
    %27 = tpu.matmul %6, %26, %cst_26 {dimension_numbers = #tpu.dot_dimension_numbers<[1], [0], [0], [1], [0, 0, 1, 1], [], []>} : vector<32x64xbf16>, vector<64x128xbf16>, vector<32x128xf32> -> vector<32x128xf32>
    %c0_27 = arith.constant 0 : index
    %c0_28 = arith.constant 0 : index
    %28 = vector.load %arg7[%c0_27, %c0_28] : memref<32x128xf32, #tpu.memory_space<vmem>>, vector<15x128xf32>
    %29 = vector.extract_strided_slice %27 {offsets = [1, 0], sizes = [15, 128], strides = [1, 1]} : vector<32x128xf32> to vector<15x128xf32>
    %30 = arith.addf %28, %29 : vector<15x128xf32>
    %c0_29 = arith.constant 0 : index
    %c0_30 = arith.constant 0 : index
    %31 = vector.load %arg7[%c0_29, %c0_30] : memref<32x128xf32, #tpu.memory_space<vmem>>, vector<15x128xf32>
    tpu.vector_store %arg7[%c0_29, %c0_30], %30 {strides = array<i32>} : memref<32x128xf32, #tpu.memory_space<vmem>>, vector<15x128xf32>,
    %c16_31 = arith.constant 16 : index
    %c0_32 = arith.constant 0 : index
    %32 = vector.load %arg7[%c16_31, %c0_32] : memref<32x128xf32, #tpu.memory_space<vmem>>, vector<15x128xf32>
    %33 = vector.extract_strided_slice %27 {offsets = [17, 0], sizes = [15, 128], strides = [1, 1]} : vector<32x128xf32> to vector<15x128xf32>
    %34 = arith.addf %32, %33 : vector<15x128xf32>
    %c16_33 = arith.constant 16 : index
    %c0_34 = arith.constant 0 : index
    %35 = vector.load %arg7[%c16_33, %c0_34] : memref<32x128xf32, #tpu.memory_space<vmem>>, vector<15x128xf32>
    tpu.vector_store %arg7[%c16_33, %c0_34], %34 {strides = array<i32>} : memref<32x128xf32, #tpu.memory_space<vmem>>, vector<15x128xf32>,
    %c0_35 = arith.constant 0 : index
    %c0_36 = arith.constant 0 : index
    %36 = vector.load %arg7[%c0_35, %c0_36] : memref<32x128xf32, #tpu.memory_space<vmem>>, vector<32x128xf32>
    %cst_37 = arith.constant 0.000000e+00 : f32
    %37 = vector.broadcast %cst_37 : f32 to vector<32x128xf32>
    %38 = arith.cmpf ogt, %36, %37 : vector<32x128xf32>
    %cst_38 = arith.constant 0.00999999977 : f32
    %39 = vector.broadcast %cst_38 : f32 to vector<32x128xf32>
    %40 = arith.mulf %39, %36 : vector<32x128xf32>
    %41 = arith.select %38, %36, %40 : vector<32x128xi1>, vector<32x128xf32>
    %c0_39 = arith.constant 0 : index
    %c0_40 = arith.constant 0 : index
    %42 = vector.load %arg4[%c0_39, %c0_40] : memref<1x128xf32, #tpu.memory_space<vmem>>, vector<1x128xf32>
    %43 = vector.broadcast %42 : vector<1x128xf32> to vector<32x128xf32>
    %44 = arith.mulf %41, %43 : vector<32x128xf32>
    %c0_41 = arith.constant 0 : index
    %c0_42 = arith.constant 0 : index
    %45 = vector.load %arg5[%c0_41, %c0_42] : memref<1x128xf32, #tpu.memory_space<vmem>>, vector<1x128xf32>
    %46 = vector.broadcast %45 : vector<1x128xf32> to vector<32x128xf32>
    %47 = arith.addf %44, %46 : vector<32x128xf32>
    %c0_43 = arith.constant 0 : index
    %c0_44 = arith.constant 0 : index
    %c0_45 = arith.constant 0 : index
    %48 = vector.load %arg6[%c0_43, %c0_44, %c0_45] : memref<1x32x128xf32, #tpu.memory_space<vmem>>, vector<1x32x128xf32>
    %49 = vector.shape_cast %48 : vector<1x32x128xf32> to vector<32x128xf32>
    %50 = vector.shape_cast %47 : vector<32x128xf32> to vector<1x32x128xf32>
    tpu.vector_store %arg6[%c0_43, %c0_44, %c0_45], %50 {strides = array<i32>} : memref<1x32x128xf32, #tpu.memory_space<vmem>>, vector<1x32x128xf32>,
    return
  }
  func.func @transform_0(%arg0: i32) -> (i32, i32, i32) {
    %c0_i32 = arith.constant 0 : i32
    %c0_i32_0 = arith.constant 0 : i32
    %c0_i32_1 = arith.constant 0 : i32
    return %arg0, %c0_i32, %c0_i32_0 : i32, i32, i32
  }
  func.func @transform_1(%arg0: i32) -> (i32, i32, i32) {
    %c0_i32 = arith.constant 0 : i32
    %c0_i32_0 = arith.constant 0 : i32
    %c0_i32_1 = arith.constant 0 : i32
    %c0_i32_2 = arith.constant 0 : i32
    return %c0_i32, %c0_i32_0, %c0_i32_1 : i32, i32, i32
  }
  func.func @transform_2(%arg0: i32) -> (i32, i32) {
    %c0_i32 = arith.constant 0 : i32
    %c0_i32_0 = arith.constant 0 : i32
    %c0_i32_1 = arith.constant 0 : i32
    return %c0_i32, %c0_i32_0 : i32, i32
  }
  func.func @transform_3(%arg0: i32) -> (i32, i32) {
    %c0_i32 = arith.constant 0 : i32
    %c0_i32_0 = arith.constant 0 : i32
    %c0_i32_1 = arith.constant 0 : i32
    return %c0_i32, %c0_i32_0 : i32, i32
  }
  func.func @transform_4(%arg0: i32) -> (i32, i32) {
    %c0_i32 = arith.constant 0 : i32
    %c0_i32_0 = arith.constant 0 : i32
    %c0_i32_1 = arith.constant 0 : i32
    return %c0_i32, %c0_i32_0 : i32, i32
  }
  func.func @transform_5(%arg0: i32) -> (i32, i32, i32) {
    %c0_i32 = arith.constant 0 : i32
    %c0_i32_0 = arith.constant 0 : i32
    %c0_i32_1 = arith.constant 0 : i32
    return %arg0, %c0_i32, %c0_i32_0 : i32, i32, i32
  }
}

</mosaic_0001>

<llo_original>
// kernel: _lambda_.1
$region0: #{_lambda_.1}
  #allocation0 [shape = 'u32[]', space=smem, size = 0x4, offset = 0x4, fixed_abs, tag = 'smem constant byte address 0x4 - core index']
  #allocation1 [shape = 'u32[72,128]{1,0:T(1,128)}', space=vmem, size = 0x9000, scoped, tag = 'internal scratch']
  #allocation2 [shape = 'f32[32,128]{1,0:T(8,128)}', space=vmem, size = 0x4000, scoped, tag = 'scratch operand']
  %s0 = inlined_call_operand.vmem [shape: f32[1,32,64], index: 0, kind: input, shape index: {}]
  %s1 = inlined_call_operand.vmem [shape: bf16[3,64,128], index: 1, kind: input, shape index: {}]
  %s2 = inlined_call_operand.vmem [shape: f32[1,128], index: 2, kind: input, shape index: {}]
  %s3 = inlined_call_operand.vmem [shape: f32[1,128], index: 3, kind: input, shape index: {}]
  %s4 = inlined_call_operand.vmem [shape: f32[1,128], index: 4, kind: input, shape index: {}]
  %s5 = inlined_call_operand.vmem [shape: f32[1,32,128], index: 5, kind: output, shape index: {}]
  %s6 = sld [smem:[#allocation0]]
  $region30: #{_lambda_.1} parent=0
    _
  %s8 = ssub.s32 1, %s6
  %s9 = scalar_select 0, %s8, %s6
  // Predicated region
  $region2: #{_lambda_.1} parent=0 // pred_check
    _
  $region3: #{_lambda_.1} parent=0 // pred_check_branch
    %11 = sbr.rel (0) target = $region5
  $region4: #{_lambda_.1} parent=0 // pred_region
    _
  $region5: #{_lambda_.1} parent=0 // pred_fallthru
    _
  // Predicated region
  $region6: #{_lambda_.1} parent=0 // pred_check
    _
  $region7: #{_lambda_.1} parent=0 // pred_check_branch
    %13 = sbr.rel (0) target = $region9
  $region8: #{_lambda_.1} parent=0 // pred_region
    _
  $region9: #{_lambda_.1} parent=0 // pred_fallthru
    _
  // Predicated region
  $region10: #{_lambda_.1} parent=0 // pred_check
    _
  $region11: #{_lambda_.1} parent=0 // pred_check_branch
    %15 = sbr.rel (0) target = $region13
  $region12: #{_lambda_.1} parent=0 // pred_region
    _
  $region13: #{_lambda_.1} parent=0 // pred_fallthru
    _
  // Predicated region
  $region14: #{_lambda_.1} parent=0 // pred_check
    _
  $region15: #{_lambda_.1} parent=0 // pred_check_branch
    %17 = sbr.rel (0) target = $region17
  $region16: #{_lambda_.1} parent=0 // pred_region
    _
  $region17: #{_lambda_.1} parent=0 // pred_fallthru
    _
  // Predicated region
  $region18: #{_lambda_.1} parent=0 // pred_check
    _
  $region19: #{_lambda_.1} parent=0 // pred_check_branch
    %19 = sbr.rel (0) target = $region21
  $region20: #{_lambda_.1} parent=0 // pred_region
    _
  $region21: #{_lambda_.1} parent=0 // pred_fallthru
    _
  %21 = vst [vmem:[#allocation2] sm:$0x1] 0.0
  %22 = vst [vmem:[#allocation2 + $0x10] sm:$0x1] 0.0
  %v23 = vld [vmem:[%s0] sm:$0xff]
  %v24 = vld [vmem:[%s0 + $0x8] sm:$0xff]
  %v25 = vld [vmem:[%s0 + $0x10] sm:$0xff]
  %v26 = vld [vmem:[%s0 + $0x18] sm:$0xff]
  %v27 = vpack.c.bf16 %v24, %v23
  %v28 = vpack.c.bf16 %v26, %v25
  %v29 = vld [vmem:[%s1] sm:$0xf]
  %v30 = vld [vmem:[%s1 + $0x4] sm:$0xf]
  %v31 = vld [vmem:[%s1 + $0x8] sm:$0xf]
  %v32 = vld [vmem:[%s1 + $0xc] sm:$0xf]
  %v33 = vld [vmem:[%s1 + $0x10] sm:$0xf]
  %v34 = vld [vmem:[%s1 + $0x14] sm:$0xf]
  %v35 = vld [vmem:[%s1 + $0x18] sm:$0xf]
  %v36 = vld [vmem:[%s1 + $0x1c] sm:$0xf]
  %v45 = vunpack.c.l.b16 %v29
  %v46 = vunpack.c.l.b16 %v30
  %v47 = vunpack.c.l.b16 %v31
  %v48 = vunpack.c.l.b16 %v32
  %v49 = vunpack.c.l.b16 %v33
  %v50 = vunpack.c.l.b16 %v34
  %v51 = vunpack.c.l.b16 %v35
  %v52 = vunpack.c.l.b16 %v36
  %v53 = vpack.c.b16 %v46, %v45
  %v54 = vpack.c.b16 %v48, %v47
  %v55 = vpack.c.b16 %v50, %v49
  %v56 = vpack.c.b16 %v52, %v51
  %vm61 = vcmask 523264
  %v63 = vsel %vm61, %v27, 0
  %v66 = vsel %vm61, %v28, 0
  %68 = vmatpush.bf16.msra.mxu0 0
  %69 = vmatpush.bf16.msra.mxu0 0
  %70 = vmatpush.bf16.msra.mxu0 0
  %71 = vmatpush.bf16.msra.mxu0 0
  %72 = vmatpush.bf16.msra.mxu0 %v56
  %73 = vmatpush.bf16.msra.mxu0 %v55
  %74 = vmatpush.bf16.msra.mxu0 %v54
  %75 = vmatpush.bf16.msra.mxu0 %v53
  %76 = vmatmul.bf16.gmra.mxu0 %v63
  %v77 = vpop.f32.mrf.mxu0
  %v78 = vadd.f32 0.0, %v77
  %v79 = vpop.f32.mrf.mxu0
  %v80 = vadd.f32 0.0, %v79
  %81 = vmatmul.bf16.gmra.mxu0 %v66
  %v82 = vpop.f32.mrf.mxu0
  %v83 = vadd.f32 0.0, %v82
  %v84 = vpop.f32.mrf.mxu0
  %v85 = vadd.f32 0.0, %v84
  %86 = vdwg.mxu0
  %87 = vst [vmem:[#allocation2 + $0x1] sm:$0xff] %v78
  %88 = vst [vmem:[#allocation2 + $0x9] sm:$0x7f] %v80
  %89 = vst [vmem:[#allocation2 + $0x11] sm:$0xff] %v83
  %90 = vst [vmem:[#allocation2 + $0x19] sm:$0x7f] %v85
  %s91 = scalar_lea.vmem %s1, 32
  %v92 = vld [vmem:[%s91] sm:$0xf]
  %v93 = vld [vmem:[%s91 + $0x4] sm:$0xf]
  %v94 = vld [vmem:[%s91 + $0x8] sm:$0xf]
  %v95 = vld [vmem:[%s91 + $0xc] sm:$0xf]
  %v96 = vld [vmem:[%s91 + $0x10] sm:$0xf]
  %v97 = vld [vmem:[%s91 + $0x14] sm:$0xf]
  %v98 = vld [vmem:[%s91 + $0x18] sm:$0xf]
  %v99 = vld [vmem:[%s91 + $0x1c] sm:$0xf]
  %v108 = vunpack.c.l.b16 %v92
  %v109 = vunpack.c.l.b16 %v93
  %v110 = vunpack.c.l.b16 %v94
  %v111 = vunpack.c.l.b16 %v95
  %v112 = vunpack.c.l.b16 %v96
  %v113 = vunpack.c.l.b16 %v97
  %v114 = vunpack.c.l.b16 %v98
  %v115 = vunpack.c.l.b16 %v99
  %v116 = vpack.c.b16 %v109, %v108
  %v117 = vpack.c.b16 %v111, %v110
  %v118 = vpack.c.b16 %v113, %v112
  %v119 = vpack.c.b16 %v115, %v114
  %124 = vmatpush.bf16.msra.mxu0 0
  %125 = vmatpush.bf16.msra.mxu0 0
  %126 = vmatpush.bf16.msra.mxu0 0
  %127 = vmatpush.bf16.msra.mxu0 0
  %128 = vmatpush.bf16.msra.mxu0 %v119
  %129 = vmatpush.bf16.msra.mxu0 %v118
  %130 = vmatpush.bf16.msra.mxu0 %v117
  %131 = vmatpush.bf16.msra.mxu0 %v116
  %132 = vmatmul.bf16.gmra.mxu0 %v63
  %v133 = vpop.f32.mrf.mxu0
  %v134 = vadd.f32 0.0, %v133
  %v135 = vpop.f32.mrf.mxu0
  %v136 = vadd.f32 0.0, %v135
  %137 = vmatmul.bf16.gmra.mxu0 %v66
  %v138 = vpop.f32.mrf.mxu0
  %v139 = vadd.f32 0.0, %v138
  %v140 = vpop.f32.mrf.mxu0
  %v141 = vadd.f32 0.0, %v140
  %142 = vdwg.mxu0
  %v143 = vld [vmem:[#allocation2] sm:$0xff]
  %v144 = vld [vmem:[#allocation2 + $0x8] sm:$0xff]
  %v145 = vadd.f32 %v143, %v134
  %v146 = vadd.f32 %v144, %v136
  %147 = vst [vmem:[#allocation2] sm:$0xff] %v145
  %148 = vst [vmem:[#allocation2 + $0x8] sm:$0xff] %v146
  %v149 = vld [vmem:[#allocation2 + $0x10] sm:$0xff]
  %v150 = vld [vmem:[#allocation2 + $0x18] sm:$0xff]
  %v151 = vadd.f32 %v149, %v139
  %v152 = vadd.f32 %v150, %v141
  %153 = vst [vmem:[#allocation2 + $0x10] sm:$0xff] %v151
  %154 = vst [vmem:[#allocation2 + $0x18] sm:$0xff] %v152
  %s155 = scalar_lea.vmem %s1, 64
  %v156 = vld [vmem:[%s155] sm:$0xf]
  %v157 = vld [vmem:[%s155 + $0x4] sm:$0xf]
  %v158 = vld [vmem:[%s155 + $0x8] sm:$0xf]
  %v159 = vld [vmem:[%s155 + $0xc] sm:$0xf]
  %v160 = vld [vmem:[%s155 + $0x10] sm:$0xf]
  %v161 = vld [vmem:[%s155 + $0x14] sm:$0xf]
  %v162 = vld [vmem:[%s155 + $0x18] sm:$0xf]
  %v163 = vld [vmem:[%s155 + $0x1c] sm:$0xf]
  %v172 = vunpack.c.l.b16 %v156
  %v173 = vunpack.c.l.b16 %v157
  %v174 = vunpack.c.l.b16 %v158
  %v175 = vunpack.c.l.b16 %v159
  %v176 = vunpack.c.l.b16 %v160
  %v177 = vunpack.c.l.b16 %v161
  %v178 = vunpack.c.l.b16 %v162
  %v179 = vunpack.c.l.b16 %v163
  %v180 = vpack.c.b16 %v173, %v172
  %v181 = vpack.c.b16 %v175, %v174
  %v182 = vpack.c.b16 %v177, %v176
  %v183 = vpack.c.b16 %v179, %v178
  %188 = vmatpush.bf16.msra.mxu0 0
  %189 = vmatpush.bf16.msra.mxu0 0
  %190 = vmatpush.bf16.msra.mxu0 0
  %191 = vmatpush.bf16.msra.mxu0 0
  %192 = vmatpush.bf16.msra.mxu0 %v183
  %193 = vmatpush.bf16.msra.mxu0 %v182
  %194 = vmatpush.bf16.msra.mxu0 %v181
  %195 = vmatpush.bf16.msra.mxu0 %v180
  %196 = vmatmul.bf16.gmra.mxu0 %v63
  %v197 = vpop.f32.mrf.mxu0
  %v198 = vadd.f32 0.0, %v197
  %v199 = vpop.f32.mrf.mxu0
  %v200 = vadd.f32 0.0, %v199
  %201 = vmatmul.bf16.gmra.mxu0 %v66
  %v202 = vpop.f32.mrf.mxu0
  %v203 = vadd.f32 0.0, %v202
  %v204 = vpop.f32.mrf.mxu0
  %v205 = vadd.f32 0.0, %v204
  %206 = vdwg.mxu0
  %v207 = vld [vmem:[#allocation2] sm:$0xff]
  %v208 = vld [vmem:[#allocation2 + $0x8] sm:$0x7f]
  %vm211 = vcmask 1046528
  %v212 = vrot.slane %v198, 1
  %v213 = vrot.slane %v200, 1
  %v214 = vsel %vm211, %v212, %v213
  %v217 = vadd.f32 %v207, %v214
  %v218 = vadd.f32 %v208, %v213
  %219 = vst [vmem:[#allocation2] sm:$0xff] %v217
  %220 = vst [vmem:[#allocation2 + $0x8] sm:$0x7f] %v218
  %v221 = vld [vmem:[#allocation2 + $0x10] sm:$0xff]
  %v222 = vld [vmem:[#allocation2 + $0x18] sm:$0x7f]
  %v225 = vrot.slane %v203, 1
  %v226 = vrot.slane %v205, 1
  %v227 = vsel %vm211, %v225, %v226
  %v230 = vadd.f32 %v221, %v227
  %v231 = vadd.f32 %v222, %v226
  %232 = vst [vmem:[#allocation2 + $0x10] sm:$0xff] %v230
  %233 = vst [vmem:[#allocation2 + $0x18] sm:$0x7f] %v231
  %v234 = vld [vmem:[#allocation2] sm:$0xff]
  %v235 = vld [vmem:[#allocation2 + $0x8] sm:$0xff]
  %v236 = vld [vmem:[#allocation2 + $0x10] sm:$0xff]
  %v237 = vld [vmem:[#allocation2 + $0x18] sm:$0xff]
  %vm238 = vcmp.gt.f32.partialorder %v234, 0.0
  %vm239 = vcmp.gt.f32.partialorder %v235, 0.0
  %vm240 = vcmp.gt.f32.partialorder %v236, 0.0
  %vm241 = vcmp.gt.f32.partialorder %v237, 0.0
  %v242 = vmul.f32 %v234, 0.01
  %v243 = vmul.f32 %v235, 0.01
  %v244 = vmul.f32 %v236, 0.01
  %v245 = vmul.f32 %v237, 0.01
  %v246 = vsel %vm238, %v234, %v242
  %v247 = vsel %vm239, %v235, %v243
  %v248 = vsel %vm240, %v236, %v244
  %v249 = vsel %vm241, %v237, %v245
  %v250 = vld [vmem:[%s3] sm:$0x1]
  %v252 = vperm.slane %v250, 0
  %v254 = vmul.f32 %v246, %v252
  %v255 = vmul.f32 %v247, %v252
  %v256 = vmul.f32 %v248, %v252
  %v257 = vmul.f32 %v249, %v252
  %v258 = vld [vmem:[%s4] sm:$0x1]
  %v260 = vperm.slane %v258, 0
  %v262 = vadd.f32 %v254, %v260
  %v263 = vadd.f32 %v255, %v260
  %v264 = vadd.f32 %v256, %v260
  %v265 = vadd.f32 %v257, %v260
  %266 = vst [vmem:[%s5] sm:$0xff] %v262
  %267 = vst [vmem:[%s5 + $0x8] sm:$0xff] %v263
  %268 = vst [vmem:[%s5 + $0x10] sm:$0xff] %v264
  %269 = vst [vmem:[%s5 + $0x18] sm:$0xff] %v265
  // Predicated region
  $region22: #{_lambda_.1} parent=0 // pred_check
    _
  $region23: #{_lambda_.1} parent=0 // pred_check_branch
    %271 = sbr.rel (0) target = $region25
  $region24: #{_lambda_.1} parent=0 // pred_region
    _
  $region25: #{_lambda_.1} parent=0 // pred_fallthru
    _
  // Predicated region
  $region26: #{_lambda_.1} parent=0 // pred_check
    _
  $region27: #{_lambda_.1} parent=0 // pred_check_branch
    %273 = sbr.rel (0) target = $region29
  $region28: #{_lambda_.1} parent=0 // pred_region
    _
  $region29: #{_lambda_.1} parent=0 // pred_fallthru
    _

</llo_original>
